<compile_context>
chip_gen: v7x
topology: tpu7x:2x2x1
jax: 0.10.0
libtpu: 0.0.40
codegen_flags: <defaults>
</compile_context>

<pallas_src>
import functools
import numpy as np

import jax
import jax.numpy as jnp
from jax import lax
from jax.experimental import pallas as pl
from jax.experimental.pallas import tpu as pltpu


def _round_up(n, m):
    return ((n + m - 1) // m) * m


def _pick_tile_v(vocab, cap):
    """Largest multiple of 128 that divides vocab and is <= cap (fallback: vocab)."""
    best = None
    t = 128
    while t <= min(cap, vocab):
        if vocab % t == 0:
            best = t
        t += 128
    return best if best is not None else vocab


# ------------------------------------------------------------------
# Kernel 1: LLM "encode" stand-in -- row-tiled linear + tanh
# ------------------------------------------------------------------
def _encode_kernel(x_ref, w_ref, b_ref, o_ref):
    # x: (TILE_M, D_in) bf16, w: (D_in, D_hid) bf16, b: (1, D_hid) f32
    h = jnp.dot(x_ref[...], w_ref[...], preferred_element_type=jnp.float32)
    o_ref[...] = jnp.tanh(h + b_ref[...]).astype(o_ref.dtype)


def llm_encode(x, w_enc, b_enc, *, tile_m=256):
    # TODO(synk): real GOFALlamaHelper.encode (7B transformer over node+edge
    # text) is external; a deterministic linear+tanh stand-in keeps the data
    # flow identical.
    n, d_in = x.shape
    d_hid = w_enc.shape[1]

    tile_m = min(int(tile_m), _round_up(n, 8))
    n_pad = _round_up(n, tile_m)

    x_bf = jnp.pad(x.astype(jnp.bfloat16), ((0, n_pad - n), (0, 0)))
    w_bf = w_enc.astype(jnp.bfloat16)
    b_f32 = b_enc.astype(jnp.float32)

    grid = (n_pad // tile_m,)

    out = pl.pallas_call(
        _encode_kernel,
        out_shape=jax.ShapeDtypeStruct((n_pad, d_hid), jnp.bfloat16),
        grid_spec=pltpu.PrefetchScalarGridSpec(
            num_scalar_prefetch=0,
            grid=grid,
            in_specs=[
                pl.BlockSpec((tile_m, d_in), lambda i: (i, 0)),
                pl.BlockSpec((d_in, d_hid), lambda i: (0, 0)),
                pl.BlockSpec((1, d_hid), lambda i: (0, 0)),
            ],
            out_specs=pl.BlockSpec((tile_m, d_hid), lambda i: (i, 0)),
        ),
        compiler_params=pltpu.CompilerParams(
            dimension_semantics=("parallel",),
            vmem_limit_bytes=64 * 1024 * 1024,
        ),
        cost_estimate=pl.CostEstimate(
            flops=2 * n_pad * d_in * d_hid,
            transcendentals=n_pad * d_hid,
            bytes_accessed=(n_pad * d_in * 2 + d_in * d_hid * 2
                            + d_hid * 4 + n_pad * d_hid * 2),
        ),
    )(x_bf, w_bf, b_f32)
    return out[:n]


# ------------------------------------------------------------------
# Kernel 2: LLM "decode" stand-in + logit_to_text argmax.
#   grid = (Q tiles, vocab tiles); vocab axis last / "arbitrary".
#   per step: (TILE_Q, D) @ (D, TILE_V) on the MXU, add positional bias,
#   write bf16 logits tile, update online argmax (f32) restricted to v_used.
# ------------------------------------------------------------------
def _decode_kernel(emb_ref, w_ref, p_ref, logits_ref, ids_ref,
                   best_val_ref, best_idx_ref, *, tile_v, v_used, t_ans):
    vi = pl.program_id(1)

    @pl.when(vi == 0)
    def _init():
        best_val_ref[...] = jnp.full_like(best_val_ref, -jnp.inf)
        best_idx_ref[...] = jnp.zeros_like(best_idx_ref)

    # (TILE_Q, D) @ (D, TILE_V) -> f32 accumulation on the MXU
    s = jnp.dot(emb_ref[...], w_ref[...], preferred_element_type=jnp.float32)
    # logits[q, t, v] = s[q, v] + p[t, v]
    logits3 = s[:, None, :] + p_ref[...][None, :, :]
    logits_ref[...] = logits3.astype(logits_ref.dtype)

    tile_start = vi * tile_v
    tile_end = tile_start + tile_v

    def _update(vals):
        # online argmax; strict ">" keeps the lowest index on ties because
        # vocab tiles are visited in increasing order and jnp.argmax takes the
        # lowest index within a tile (matches torch/jnp argmax semantics).
        local_max = jnp.max(vals, axis=-1)                                  # (TILE_Q, T)
        local_arg = jnp.argmax(vals, axis=-1).astype(jnp.int32) + tile_start
        better = local_max > best_val_ref[...]
        best_idx_ref[...] = jnp.where(better, local_arg, best_idx_ref[...])
        best_val_ref[...] = jnp.maximum(local_max, best_val_ref[...])

    # Fully valid vocab tile: no per-element mask needed.
    @pl.when(tile_end <= v_used)
    def _full():
        _update(logits3)

    # Boundary tile straddling v_used: mask the tail columns with -inf.
    @pl.when(jnp.logical_and(tile_start < v_used, tile_end > v_used))
    def _partial():
        col = tile_start + lax.broadcasted_iota(jnp.int32, logits3.shape, 2)
        _update(jnp.where(col < v_used, logits3, -jnp.inf))

    # Tiles fully beyond v_used: skip the argmax update entirely.

    @pl.when(vi == pl.num_programs(1) - 1)
    def _finalize():
        ids_ref[...] = jnp.zeros_like(ids_ref)        # lane-dense int32 slab
        ids_ref[:, :t_ans] = best_idx_ref[...]


def llm_decode(emb, question_index, w_dec, p_dec, v_used, *, tile_q=128, tile_v=2048):
    # TODO(synk): real GOFALlamaHelper.decode (7B decoder over memory embeddings
    # + prompt text) is external; linear projection + positional bias stand-in.
    _, d_hid = emb.shape
    q = question_index.shape[0]
    t_ans, vocab = p_dec.shape

    tile_v = _pick_tile_v(vocab, int(tile_v))
    tile_q = min(int(tile_q), _round_up(q, 8))
    q_pad = _round_up(q, tile_q)
    t_lane = _round_up(t_ans, 128)
    n_v = vocab // tile_v

    # Data-dependent row gather done once up front (jnp.take) so that a full
    # Q-tile feeds the matmul M dimension.
    emb_q = jnp.take(emb.astype(jnp.bfloat16), question_index, axis=0)
    emb_q = jnp.pad(emb_q, ((0, q_pad - q), (0, 0)))
    w_bf = w_dec.astype(jnp.bfloat16)
    p_f32 = p_dec.astype(jnp.float32)

    kernel = functools.partial(_decode_kernel, tile_v=tile_v, v_used=int(v_used),
                               t_ans=t_ans)

    logits, ids = pl.pallas_call(
        kernel,
        out_shape=(
            jax.ShapeDtypeStruct((q_pad, t_ans, vocab), jnp.bfloat16),
            jax.ShapeDtypeStruct((q_pad, t_lane), jnp.int32),
        ),
        grid_spec=pltpu.PrefetchScalarGridSpec(
            num_scalar_prefetch=0,
            grid=(q_pad // tile_q, n_v),
            in_specs=[
                pl.BlockSpec((tile_q, d_hid), lambda qi, vi: (qi, 0)),
                pl.BlockSpec((d_hid, tile_v), lambda qi, vi: (0, vi)),
                pl.BlockSpec((t_ans, tile_v), lambda qi, vi: (0, vi)),
            ],
            out_specs=(
                pl.BlockSpec((tile_q, t_ans, tile_v), lambda qi, vi: (qi, 0, vi)),
                pl.BlockSpec((tile_q, t_lane), lambda qi, vi: (qi, 0)),
            ),
            scratch_shapes=[
                pltpu.VMEM((tile_q, t_ans), jnp.float32),   # running max
                pltpu.VMEM((tile_q, t_ans), jnp.int32),     # running argmax
            ],
        ),
        compiler_params=pltpu.CompilerParams(
            dimension_semantics=("parallel", "arbitrary"),
            vmem_limit_bytes=64 * 1024 * 1024,
        ),
        cost_estimate=pl.CostEstimate(
            flops=2 * q_pad * d_hid * vocab + 2 * q_pad * t_ans * vocab,
            transcendentals=0,
            bytes_accessed=(q_pad * d_hid * 2 + d_hid * vocab * 2
                            + t_ans * vocab * 4
                            + q_pad * t_ans * vocab * 2 + q_pad * t_lane * 4),
        ),
    )(emb_q, w_bf, p_f32)
    return logits[:q], ids[:q, :t_ans]


# ------------------------------------------------------------------
# GOFA wrapper (mode='autoencoder'): forward = decode(encode(g))
# ------------------------------------------------------------------
class GOFAPallas:
    def __init__(self, d_in, d_hid, t_ans, vocab, vocab_used, key,
                 *, tile_m=256, tile_q=128, tile_v=2048):
        self.vocab_used = vocab_used
        self.tile_m, self.tile_q, self.tile_v = tile_m, tile_q, tile_v
        k1, k2, k3, k4 = jax.random.split(key, 4)
        # deterministic synthetic "LLM" parameters
        self.w_enc = jax.random.normal(k1, (d_in, d_hid), jnp.float32) * 0.1
        self.b_enc = jax.random.normal(k2, (1, d_hid), jnp.float32) * 0.1
        self.w_dec = jax.random.normal(k3, (d_hid, vocab), jnp.float32) * 0.1
        self.p_dec = jax.random.normal(k4, (t_ans, vocab), jnp.float32) * 0.1

    def auto_encode(self, g):
        g["num_node_feat"] = g["x"].shape[0]
        if g.get("edge_attr") is not None:
            text_inputs = jnp.concatenate([g["x"], g["edge_attr"]], axis=0)
        else:
            text_inputs = g["x"]
        # Only emb_all[:len(node_map)] is kept (g.x = llm_output[:node_map.size(-1)]),
        # and the stand-in encoder is row-wise, so rows that would be discarded
        # are never encoded.
        n_keep = g["node_map"].shape[-1]
        g["x"] = llm_encode(text_inputs[:n_keep], self.w_enc, self.b_enc,
                            tile_m=self.tile_m)
        return g

    def auto_decode(self, g):
        # TODO(synk): prompt_texts / answer_texts string handling (tokenizer,
        # 'Please complete the sentence' filtering) is host-side and omitted.
        emb = g["x"]
        answer_logits, token_ids = llm_decode(
            emb, g["question_index"], self.w_dec, self.p_dec, self.vocab_used,
            tile_q=self.tile_q, tile_v=self.tile_v,
        )
        return {
            "logits": answer_logits,   # [Q, T, V] bf16
            "answer_id": token_ids,    # argmax over vocab[:vocab_used], [Q, T]
            "masks": g["masks"],       # [Q, T] bool
        }

    def forward(self, g):
        g = self.auto_encode(g)
        return self.auto_decode(g)


if __name__ == "__main__":
    # small synthetic graph batch
    N_NODES, N_EDGES = 8, 8
    D_IN, D_HID = 32, 128
    T_ANS = 8
    VOCAB, VOCAB_USED = 512, 320       # stands in for 32132 / 32000
    Q = 4

    key = jax.random.PRNGKey(0)
    kx, ke, kp = jax.random.split(key, 3)

    x0 = jax.random.normal(kx, (N_NODES, D_IN), jnp.float32)
    g = {
        "x": x0,
        "edge_attr": jax.random.normal(ke, (N_EDGES, D_IN), jnp.float32),
        "node_map": jnp.arange(N_NODES, dtype=jnp.int32),
        "question_index": jnp.array([1, 3, 5, 7], dtype=jnp.int32),
        "masks": jnp.array([[True] * 5 + [False] * 3] * Q, dtype=bool),
    }

    # tile_v=128 so the demo exercises multiple vocab tiles + the boundary mask
    model = GOFAPallas(D_IN, D_HID, T_ANS, VOCAB, VOCAB_USED, kp,
                       tile_m=256, tile_q=8, tile_v=128)
    out = model.forward(g)

    logits = jax.block_until_ready(out["logits"])
    token_ids = jax.block_until_ready(out["answer_id"])
    emb_kernel = jax.block_until_ready(g["x"])        # encoded node embeddings (bf16)

    # ---------------- correctness check vs. pure-JAX reference ----------------
    emb_ref = jnp.tanh(
        jnp.dot(x0[:N_NODES].astype(jnp.bfloat16),
                model.w_enc.astype(jnp.bfloat16),
                preferred_element_type=jnp.float32) + model.b_enc)
    np.testing.assert_allclose(np.asarray(emb_kernel, np.float32),
                               np.asarray(emb_ref), rtol=2e-2, atol=2e-2)

    emb_q_ref = jnp.take(emb_kernel, g["question_index"], axis=0)
    s_ref = jnp.dot(emb_q_ref, model.w_dec.astype(jnp.bfloat16),
                    preferred_element_type=jnp.float32)
    logits_ref = s_ref[:, None, :] + model.p_dec[None, :, :]
    ids_ref = jnp.argmax(logits_ref[..., :VOCAB_USED], axis=-1).astype(jnp.int32)

    np.testing.assert_allclose(np.asarray(logits, np.float32),
                               np.asarray(logits_ref), rtol=5e-2, atol=5e-2)
    np.testing.assert_array_equal(np.asarray(token_ids), np.asarray(ids_ref))

    # final GOFA output glue: logits[masks][:, :32000] (boolean masking gives a
    # dynamic shape -> done on host, like the tokenizer decode it feeds into).
    masks_np = np.asarray(out["masks"])
    masked_logits = np.asarray(logits, np.float32)[masks_np][:, :VOCAB_USED]
    # TODO(synk): tokenizer.batch_decode (string detokenization) has no Pallas
    # equivalent; token_ids above are the argmax ids that would be decoded.

    assert masked_logits.shape == (int(masks_np.sum()), VOCAB_USED)
    assert token_ids.shape == (Q, T_ANS)
    assert int(np.max(np.asarray(token_ids))) < VOCAB_USED

    print("KERNEL_OK")
</pallas_src>

<mosaic_0001>
module attributes {stable_mosaic.version = 11 : i64} {
  func.func @_encode_kernel(%arg0: i32, %arg1: memref<8x32xbf16, #tpu.memory_space<vmem>>, %arg2: memref<32x128xbf16, #tpu.memory_space<vmem>>, %arg3: memref<1x128xf32, #tpu.memory_space<vmem>>, %arg4: memref<8x128xbf16, #tpu.memory_space<vmem>>) attributes {dimension_semantics = [#tpu.dimension_semantics<parallel>], iteration_bounds = array<i64: 1>, scalar_prefetch = 0 : i64, scratch_operands = 0 : i64, tpu.core_type = #tpu.core_type<tc>, window_params = [{transform_indices = @transform_0, window_bounds = array<i64: 8, 32>}, {pipeline_mode = #tpu.pipeline_mode<synchronous>, transform_indices = @transform_1, window_bounds = array<i64: 32, 128>}, {pipeline_mode = #tpu.pipeline_mode<synchronous>, transform_indices = @transform_2, window_bounds = array<i64: 1, 128>}, {transform_indices = @transform_3, window_bounds = array<i64: 8, 128>}]} {
    %c0 = arith.constant 0 : index
    %c0_0 = arith.constant 0 : index
    %0 = vector.load %arg1[%c0, %c0_0] : memref<8x32xbf16, #tpu.memory_space<vmem>>, vector<8x32xbf16>
    %c0_1 = arith.constant 0 : index
    %c0_2 = arith.constant 0 : index
    %1 = vector.load %arg2[%c0_1, %c0_2] : memref<32x128xbf16, #tpu.memory_space<vmem>>, vector<32x128xbf16>
    %cst = arith.constant dense<0.000000e+00> : vector<8x128xf32>
    %2 = tpu.matmul %0, %1, %cst {dimension_numbers = #tpu.dot_dimension_numbers<[1], [0], [0], [1], [0, 0, 1, 1], [], []>} : vector<8x32xbf16>, vector<32x128xbf16>, vector<8x128xf32> -> vector<8x128xf32>
    %c0_3 = arith.constant 0 : index
    %c0_4 = arith.constant 0 : index
    %3 = vector.load %arg3[%c0_3, %c0_4] : memref<1x128xf32, #tpu.memory_space<vmem>>, vector<1x128xf32>
    %4 = vector.broadcast %3 : vector<1x128xf32> to vector<8x128xf32>
    %5 = arith.addf %2, %4 : vector<8x128xf32>
    %6 = math.tanh %5 : vector<8x128xf32>
    %7 = arith.truncf %6 : vector<8x128xf32> to vector<8x128xbf16>
    %c0_5 = arith.constant 0 : index
    %c0_6 = arith.constant 0 : index
    %8 = vector.load %arg4[%c0_5, %c0_6] : memref<8x128xbf16, #tpu.memory_space<vmem>>, vector<8x128xbf16>
    tpu.vector_store %arg4[%c0_5, %c0_6], %7 {strides = array<i32>} : memref<8x128xbf16, #tpu.memory_space<vmem>>, vector<8x128xbf16>,
    return
  }
  func.func @transform_0(%arg0: i32) -> (i32, i32) {
    %c0_i32 = arith.constant 0 : i32
    %c0_i32_0 = arith.constant 0 : i32
    return %arg0, %c0_i32 : i32, i32
  }
  func.func @transform_1(%arg0: i32) -> (i32, i32) {
    %c0_i32 = arith.constant 0 : i32
    %c0_i32_0 = arith.constant 0 : i32
    %c0_i32_1 = arith.constant 0 : i32
    return %c0_i32, %c0_i32_0 : i32, i32
  }
  func.func @transform_2(%arg0: i32) -> (i32, i32) {
    %c0_i32 = arith.constant 0 : i32
    %c0_i32_0 = arith.constant 0 : i32
    %c0_i32_1 = arith.constant 0 : i32
    return %c0_i32, %c0_i32_0 : i32, i32
  }
  func.func @transform_3(%arg0: i32) -> (i32, i32) {
    %c0_i32 = arith.constant 0 : i32
    %c0_i32_0 = arith.constant 0 : i32
    return %arg0, %c0_i32 : i32, i32
  }
}

</mosaic_0001>

<llo_original>
// kernel: tpu_custom_call.1
$region0: #{tpu_custom_call.1}
  #allocation0 [shape = 'u32[]', space=smem, size = 0x4, offset = 0x4, fixed_abs, tag = 'smem constant byte address 0x4 - core index']
  #allocation1 [shape = 'u32[144,128]{1,0:T(1,128)}', space=vmem, size = 0x12000, scoped, tag = 'internal scratch']
  %s0 = inlined_call_operand.hbm [shape: bf16[8,32], index: 0, kind: input, shape index: {}]
  %s1 = inlined_call_operand.hbm [shape: bf16[32,128], index: 1, kind: input, shape index: {}]
  %s2 = inlined_call_operand.hbm [shape: f32[1,128], index: 2, kind: input, shape index: {}]
  %s3 = inlined_call_operand.hbm [shape: bf16[8,128], index: 3, kind: output, shape index: {}]
  %s4 = sld [smem:[#allocation0]]
  $region34: #{tpu_custom_call.1} parent=0
    _
  %s6 = ssub.s32 1, %s4
  %s7 = scalar_select 0, %s6, %s4
  $region1: #{tpu_custom_call.1} parent=0
    #allocation2 [shape = 'u8[2048]{0}', space=vmem, size = 0x800, scoped, tag = 'input window, operand 0, single buffered']
    #allocation3 [shape = 's32[1]{0}', space=sflag, size = 0x4, scoped, tag = 'scoped memory for tpu_custom_call.1']
    #allocation4 [shape = 's32[1]{0}', space=sflag, size = 0x4, scoped, tag = 'scoped memory for tpu_custom_call.1']
    #allocation5 [shape = 'u8[8192]{0}', space=vmem, size = 0x2000, scoped, tag = 'input window, operand 1, single buffered']
    #allocation6 [shape = 's32[1]{0}', space=sflag, size = 0x4, scoped, tag = 'scoped memory for tpu_custom_call.1']
    #allocation7 [shape = 'u8[512]{0}', space=vmem, size = 0x400, scoped, tag = 'input window, operand 2, single buffered']
    #allocation8 [shape = 'u8[2048]{0}', space=vmem, size = 0x800, scoped, tag = 'output window, operand 0, single buffered']
    %8 = vsyncpa [#allocation3], 0
    %9 = vsyncpa [#allocation6], 0
    %10 = vsyncpa [#allocation4], 0
    // Predicated region
    $region2: #{tpu_custom_call.1} parent=1 // pred_check
      _
    $region3: #{tpu_custom_call.1} parent=1 // pred_check_branch
      %12 = sbr.rel (0) target = $region5
    $region4: #{tpu_custom_call.1} parent=1 // pred_region
      %s14 = ssub.s32 64, 64
      %15 = vsyncadd [#allocation3], %s14
      %s17 = sshll.u32 [#allocation2], 4
      %s18 = int_to_ptr.vmem [resolvable:$true] %s17
      %20 = dma.hbm_to_vmem [thread:$0]  %s0, 64, %s18, [#allocation3]
    $region5: #{tpu_custom_call.1} parent=1 // pred_fallthru
      _
    // Predicated region
    $region6: #{tpu_custom_call.1} parent=1 // pred_check
      _
    $region7: #{tpu_custom_call.1} parent=1 // pred_check_branch
      %22 = sbr.rel (0) target = $region9
    $region8: #{tpu_custom_call.1} parent=1 // pred_region
      %s24 = ssub.s32 256, 256
      %25 = vsyncadd [#allocation6], %s24
      %s26 = sshll.u32 [#allocation5], 4
      %s27 = int_to_ptr.vmem [resolvable:$true] %s26
      %32 = dma.hbm_to_vmem [thread:$0]  %s1, 256, %s27, [#allocation6], 64, 64, 4
    $region9: #{tpu_custom_call.1} parent=1 // pred_fallthru
      _
    // Predicated region
    $region10: #{tpu_custom_call.1} parent=1 // pred_check
      _
    $region11: #{tpu_custom_call.1} parent=1 // pred_check_branch
      %34 = sbr.rel (0) target = $region13
    $region12: #{tpu_custom_call.1} parent=1 // pred_region
      %s36 = ssub.s32 16, 16
      %37 = vsyncadd [#allocation6], %s36
      %s39 = sshll.u32 [#allocation7], 4
      %s40 = int_to_ptr.vmem [resolvable:$true] %s39
      %42 = dma.hbm_to_vmem [thread:$0]  %s2, 16, %s40, [#allocation6]
    $region13: #{tpu_custom_call.1} parent=1 // pred_fallthru
      _
    // Predicated region
    $region14: #{tpu_custom_call.1} parent=1 // pred_check
      _
    $region15: #{tpu_custom_call.1} parent=1 // pred_check_branch
      %44 = sbr.rel (0) target = $region17
    $region16: #{tpu_custom_call.1} parent=1 // pred_region
      %45 = dma.done [#allocation3], 64
    $region17: #{tpu_custom_call.1} parent=1 // pred_fallthru
      _
    // Predicated region
    $region18: #{tpu_custom_call.1} parent=1 // pred_check
      _
    $region19: #{tpu_custom_call.1} parent=1 // pred_check_branch
      %47 = sbr.rel (0) target = $region21
    $region20: #{tpu_custom_call.1} parent=1 // pred_region
      %48 = dma.done [#allocation6], 256
    $region21: #{tpu_custom_call.1} parent=1 // pred_fallthru
      _
    // Predicated region
    $region22: #{tpu_custom_call.1} parent=1 // pred_check
      _
    $region23: #{tpu_custom_call.1} parent=1 // pred_check_branch
      %50 = sbr.rel (0) target = $region25
    $region24: #{tpu_custom_call.1} parent=1 // pred_region
      %51 = dma.done [#allocation6], 16
    $region25: #{tpu_custom_call.1} parent=1 // pred_fallthru
      _
    %v53 = vld [vmem:[#allocation2] sm:$0xf]
    %v54 = vld [vmem:[#allocation5] sm:$0xf]
    %v55 = vld [vmem:[#allocation5 + $0x4] sm:$0xf]
    %v56 = vld [vmem:[#allocation5 + $0x8] sm:$0xf]
    %v57 = vld [vmem:[#allocation5 + $0xc] sm:$0xf]
    %v58 = vld [vmem:[#allocation7] sm:$0x1]
    %v60 = vlaneseq
    %v61 = vshrl.u32 %v60, 7
    %v62 = vsub.s32 0, %v61
    %v63 = vrot.slane %v58, %v62
    %v69 = vunpack.c.l.b16 %v54
    %v70 = vunpack.c.l.b16 %v55
    %v71 = vunpack.c.l.b16 %v56
    %v72 = vunpack.c.l.b16 %v57
    %v73 = vpack.c.b16 %v70, %v69
    %v74 = vpack.c.b16 %v72, %v71
    %vm77 = vcmask 261120
    %v79 = vsel %vm77, %v53, 0
    %81 = vmatprep.subr.bf16.mxu0 0
    %82 = vmatpush1.bf16.msra.mxu0 %v73
    %83 = vmatprep.subr.bf16.mxu0 0
    %84 = vmatpush1.bf16.msra.mxu0 %v74
    %85 = vmatprep.subr.bf16.mxu0 0
    %86 = vmatpush1.bf16.msra.mxu0 0
    %87 = vmatprep.subr.bf16.mxu0 0
    %88 = vmatpush1.bf16.msra.mxu0 0
    %89 = vmatprep.subr.bf16.mxu0 0
    %90 = vmatpush1.bf16.msra.mxu0 0
    %91 = vmatprep.subr.bf16.mxu0 0
    %92 = vmatpush1.bf16.msra.mxu0 0
    %93 = vmatprep.subr.bf16.mxu0 0
    %94 = vmatpush1.bf16.msra.mxu0 0
    %95 = vmatprep.subr.bf16.mxu0 0
    %96 = vmatpush1.bf16.msra.mxu0 0
    %97 = vmatprep.subr.bf16.mxu0 0
    %98 = vmatpush1.bf16.msra.mxu0 0
    %99 = vmatprep.subr.bf16.mxu0 0
    %100 = vmatpush1.bf16.msra.mxu0 0
    %101 = vmatprep.subr.bf16.mxu0 0
    %102 = vmatpush1.bf16.msra.mxu0 0
    %103 = vmatprep.subr.bf16.mxu0 0
    %104 = vmatpush1.bf16.msra.mxu0 0
    %105 = vmatprep.subr.bf16.mxu0 0
    %106 = vmatpush1.bf16.msra.mxu0 0
    %107 = vmatprep.subr.bf16.mxu0 0
    %108 = vmatpush1.bf16.msra.mxu0 0
    %109 = vmatprep.subr.bf16.mxu0 0
    %110 = vmatpush1.bf16.msra.mxu0 0
    %111 = vmatprep.subr.bf16.mxu0 0
    %112 = vmatpush1.bf16.msra.mxu0 0
    %113 = vmatprep.mubr.bf16.mxu0 0
    %114 = vmatmul.mubr.bf16.gmra.mrb[0].mxu0 %v79
    %v115 = vpop.f32.mrb[0].mxu0
    %v116 = vadd.f32 %v63, %v115
    %v117 = vpop.f32.mrb[0].mxu0
    %v118 = vpop.f32.mrb[0].mxu0
    %v119 = vpop.f32.mrb[0].mxu0
    %120 = vdwg.mxu0
    %v121 = vtanh.pop %v116
    %v122 = vpack.c.bf16 %v121, %v121
    %123 = vst [vmem:[#allocation8] sm:$0xf] %v122
    // Predicated region
    $region26: #{tpu_custom_call.1} parent=1 // pred_check
      _
    $region27: #{tpu_custom_call.1} parent=1 // pred_check_branch
      %125 = sbr.rel (0) target = $region29
    $region28: #{tpu_custom_call.1} parent=1 // pred_region
      %s127 = ssub.s32 64, 64
      %128 = vsyncadd [#allocation4], %s127
      %s130 = sshll.u32 [#allocation8], 4
      %s131 = int_to_ptr.vmem [resolvable:$true] %s130
      %133 = dma.vmem_to_hbm [thread:$0]  %s131, 64, %s3, [#allocation4]
    $region29: #{tpu_custom_call.1} parent=1 // pred_fallthru
      _
    // Predicated region
    $region30: #{tpu_custom_call.1} parent=1 // pred_check
      _
    $region31: #{tpu_custom_call.1} parent=1 // pred_check_branch
      %135 = sbr.rel (0) target = $region33
    $region32: #{tpu_custom_call.1} parent=1 // pred_region
      %136 = dma.done [#allocation4], 64
    $region33: #{tpu_custom_call.1} parent=1 // pred_fallthru
      _
    %137 = vsyncpa [#allocation3], 1
    %138 = vsyncpa [#allocation6], 1
    %139 = vsyncpa [#allocation4], 1

</llo_original>
